<compile_context>
chip_gen: v6e
topology: v6e:2x2x1
jax: 0.10.0
libtpu: 0.0.40
codegen_flags: <defaults>
</compile_context>

<pallas_src>
import math
import functools

import jax
import jax.numpy as jnp
from jax.experimental import pallas as pl
from jax.experimental.pallas import tpu as pltpu


def _round_up(x, m):
    return ((x + m - 1) // m) * m


def _mylinear_kernel(x_ref, w_ref, b_ref, o_ref):
    """One (i, j, k) grid step of out = x @ w + b.

    x_ref : (tm, tk)  block of input
    w_ref : (tk, tn)  block of weight.T (already (K, N) layout)
    b_ref : (1,  tn)  block of bias (k-invariant)
    o_ref : (tm, tn)  f32 output block, resident across the k axis (acts as
                      the accumulator -> no scratch needed).
    """
    k = pl.program_id(2)

    @pl.when(k == 0)
    def _():
        o_ref[...] = jnp.zeros_like(o_ref)

    o_ref[...] += jnp.dot(x_ref[...], w_ref[...],
                          preferred_element_type=jnp.float32)

    @pl.when(k == pl.num_programs(2) - 1)
    def _():
        o_ref[...] += b_ref[...]


@functools.partial(jax.jit, static_argnames=("tm", "tn", "tk", "compute_dtype"))
def my_linear(x, weight, bias, *, tm=None, tn=None, tk=None,
              compute_dtype=jnp.float32):
    """Pallas implementation of myLinear.forward: x @ weight.T + bias."""
    M, K = x.shape
    N, K2 = weight.shape
    assert K == K2, "Wrong Input Features"
    assert bias.shape == (N,)

    # Tile selection: large tiles to keep the MXU fed and amortize per-step
    # pipeline overhead, capped to the padded problem size.
    if tm is None:
        tm = min(256, _round_up(M, 8))
    if tn is None:
        tn = min(512, _round_up(N, 128))
    if tk is None:
        tk = min(1024, _round_up(K, 128))

    Mp, Np, Kp = _round_up(M, tm), _round_up(N, tn), _round_up(K, tk)

    # One-time host-side transpose of the static (out, in) weight to (K, N).
    w_t = weight.T.astype(compute_dtype)
    x_c = x.astype(compute_dtype)
    b2d = bias.reshape(1, N).astype(jnp.float32)

    # Zero-pad so every tile is full: padded-K contributes exact zeros to the
    # contraction; padded M/N rows/cols are cropped after the call.
    if (Mp, Kp) != (M, K):
        x_c = jnp.pad(x_c, ((0, Mp - M), (0, Kp - K)))
    if (Kp, Np) != (K, N):
        w_t = jnp.pad(w_t, ((0, Kp - K), (0, Np - N)))
    if Np != N:
        b2d = jnp.pad(b2d, ((0, 0), (0, Np - N)))

    grid = (Mp // tm, Np // tn, Kp // tk)

    bpe = jnp.dtype(compute_dtype).itemsize
    # Double-buffered x / w / bias tiles + double-buffered f32 output tile.
    vmem_need = 2 * (tm * tk * bpe + tk * tn * bpe + tn * 4) + 2 * tm * tn * 4
    vmem_limit = min(max(32 * 1024 * 1024, (vmem_need * 3) // 2),
                     48 * 1024 * 1024)   # stay v7x-safe (64 MiB physical)

    out = pl.pallas_call(
        _mylinear_kernel,
        out_shape=jax.ShapeDtypeStruct((Mp, Np), jnp.float32),
        grid_spec=pltpu.PrefetchScalarGridSpec(
            num_scalar_prefetch=0,
            grid=grid,
            in_specs=[
                pl.BlockSpec((tm, tk), lambda i, j, k: (i, k)),   # x
                pl.BlockSpec((tk, tn), lambda i, j, k: (k, j)),   # weight.T
                pl.BlockSpec((1, tn), lambda i, j, k: (0, j)),    # bias
            ],
            out_specs=pl.BlockSpec((tm, tn), lambda i, j, k: (i, j)),
        ),
        compiler_params=pltpu.CompilerParams(
            dimension_semantics=("parallel", "parallel", "arbitrary"),
            vmem_limit_bytes=int(vmem_limit),
        ),
        cost_estimate=pl.CostEstimate(
            flops=2 * M * N * K,
            transcendentals=0,
            bytes_accessed=bpe * (M * K + K * N) + 4 * (M * N + N),
        ),
    )(x_c, w_t, b2d)

    return out[:M, :N]


def init_mylinear_params(key, in_features, out_features):
    """Deterministic re-implementation of myLinear.reset_parameters().

    kaiming_uniform_(a=sqrt(5)) on a (out, in) weight reduces to
    U(-1/sqrt(fan_in), 1/sqrt(fan_in)); bias uses the same bound.
    """
    kw, kb = jax.random.split(key)
    bound = 1.0 / math.sqrt(in_features)
    weight = jax.random.uniform(
        kw, (out_features, in_features), jnp.float32, -bound, bound)
    bias = jax.random.uniform(
        kb, (out_features,), jnp.float32, -bound, bound)
    return weight, bias


if __name__ == "__main__":
    key = jax.random.PRNGKey(0)
    kx, kp2, kp3 = jax.random.split(key, 3)

    # fc2-like layer of TextClassificationModel2: 1024 -> 128, batch 16.
    batch, in_features, out_features = 16, 1024, 128
    x = jax.random.normal(kx, (batch, in_features), dtype=jnp.float32)
    weight, bias = init_mylinear_params(kp2, in_features, out_features)

    out = jax.block_until_ready(my_linear(x, weight, bias))
    ref = x @ weight.T + bias
    assert out.shape == (batch, out_features)
    assert jnp.allclose(out, ref, atol=1e-4, rtol=1e-4), "f32 mismatch (fc2)"

    # fc3-like layer: 128 -> n_classes, exercises the N-padding path.
    n_classes = 4
    w3, b3 = init_mylinear_params(kp3, out_features, n_classes)
    h = jax.nn.relu(out)
    out3 = jax.block_until_ready(my_linear(h, w3, b3))
    ref3 = h @ w3.T + b3
    assert out3.shape == (batch, n_classes)
    assert jnp.allclose(out3, ref3, atol=1e-4, rtol=1e-4), "f32 mismatch (fc3)"

    # Optional bf16 compute path (f32 accumulation), looser tolerance.
    out_bf16 = jax.block_until_ready(
        my_linear(x, weight, bias, compute_dtype=jnp.bfloat16))
    assert jnp.allclose(out_bf16, ref, atol=5e-2, rtol=5e-2), "bf16 mismatch"

    print("KERNEL_OK")
</pallas_src>

<mosaic_0001>
module attributes {stable_mosaic.version = 11 : i64} {
  func.func @_mylinear_kernel(%arg0: i32, %arg1: i32, %arg2: i32, %arg3: memref<16x1024xf32, #tpu.memory_space<vmem>>, %arg4: memref<1024x128xf32, #tpu.memory_space<vmem>>, %arg5: memref<1x128xf32, #tpu.memory_space<vmem>>, %arg6: memref<16x128xf32, #tpu.memory_space<vmem>>) attributes {dimension_semantics = [#tpu.dimension_semantics<parallel>, #tpu.dimension_semantics<parallel>, #tpu.dimension_semantics<arbitrary>], iteration_bounds = array<i64: 1, 1, 1>, scalar_prefetch = 0 : i64, scratch_operands = 0 : i64, tpu.core_type = #tpu.core_type<tc>, window_params = [{transform_indices = @transform_0, window_bounds = array<i64: 16, 1024>}, {transform_indices = @transform_1, window_bounds = array<i64: 1024, 128>}, {transform_indices = @transform_2, window_bounds = array<i64: 1, 128>}, {transform_indices = @transform_3, window_bounds = array<i64: 16, 128>}]} {
    %c0_i32 = arith.constant 0 : i32
    %0 = arith.cmpi eq, %arg2, %c0_i32 : i32
    %1 = arith.extui %0 : i1 to i32
    %c0_i32_0 = arith.constant 0 : i32
    %2 = arith.cmpi ne, %1, %c0_i32_0 : i32
    scf.if %2 {
      %cst_10 = arith.constant 0.000000e+00 : f32
      %12 = vector.broadcast %cst_10 : f32 to vector<16x128xf32>
      %c0_11 = arith.constant 0 : index
      %c0_12 = arith.constant 0 : index
      %13 = vector.load %arg6[%c0_11, %c0_12] : memref<16x128xf32, #tpu.memory_space<vmem>>, vector<16x128xf32>
      tpu.vector_store %arg6[%c0_11, %c0_12], %12 {strides = array<i32>} : memref<16x128xf32, #tpu.memory_space<vmem>>, vector<16x128xf32>,
    } else {
    }
    %c0 = arith.constant 0 : index
    %c0_1 = arith.constant 0 : index
    %3 = vector.load %arg6[%c0, %c0_1] : memref<16x128xf32, #tpu.memory_space<vmem>>, vector<16x128xf32>
    %c0_2 = arith.constant 0 : index
    %c0_3 = arith.constant 0 : index
    %4 = vector.load %arg3[%c0_2, %c0_3] : memref<16x1024xf32, #tpu.memory_space<vmem>>, vector<16x1024xf32>
    %c0_4 = arith.constant 0 : index
    %c0_5 = arith.constant 0 : index
    %5 = vector.load %arg4[%c0_4, %c0_5] : memref<1024x128xf32, #tpu.memory_space<vmem>>, vector<1024x128xf32>
    %cst = arith.constant dense<0.000000e+00> : vector<16x128xf32>
    %6 = tpu.matmul %4, %5, %cst {dimension_numbers = #tpu.dot_dimension_numbers<[1], [0], [0], [1], [0, 0, 1, 1], [], []>} : vector<16x1024xf32>, vector<1024x128xf32>, vector<16x128xf32> -> vector<16x128xf32>
    %7 = arith.addf %3, %6 : vector<16x128xf32>
    %c0_6 = arith.constant 0 : index
    %c0_7 = arith.constant 0 : index
    %8 = vector.load %arg6[%c0_6, %c0_7] : memref<16x128xf32, #tpu.memory_space<vmem>>, vector<16x128xf32>
    tpu.vector_store %arg6[%c0_6, %c0_7], %7 {strides = array<i32>} : memref<16x128xf32, #tpu.memory_space<vmem>>, vector<16x128xf32>,
    %c0_i32_8 = arith.constant 0 : i32
    %9 = arith.cmpi eq, %arg2, %c0_i32_8 : i32
    %10 = arith.extui %9 : i1 to i32
    %c0_i32_9 = arith.constant 0 : i32
    %11 = arith.cmpi ne, %10, %c0_i32_9 : i32
    scf.if %11 {
      %c0_10 = arith.constant 0 : index
      %c0_11 = arith.constant 0 : index
      %12 = vector.load %arg6[%c0_10, %c0_11] : memref<16x128xf32, #tpu.memory_space<vmem>>, vector<16x128xf32>
      %c0_12 = arith.constant 0 : index
      %c0_13 = arith.constant 0 : index
      %13 = vector.load %arg5[%c0_12, %c0_13] : memref<1x128xf32, #tpu.memory_space<vmem>>, vector<1x128xf32>
      %14 = vector.broadcast %13 : vector<1x128xf32> to vector<16x128xf32>
      %15 = arith.addf %12, %14 : vector<16x128xf32>
      %c0_14 = arith.constant 0 : index
      %c0_15 = arith.constant 0 : index
      %16 = vector.load %arg6[%c0_14, %c0_15] : memref<16x128xf32, #tpu.memory_space<vmem>>, vector<16x128xf32>
      tpu.vector_store %arg6[%c0_14, %c0_15], %15 {strides = array<i32>} : memref<16x128xf32, #tpu.memory_space<vmem>>, vector<16x128xf32>,
    } else {
    }
    return
  }
  func.func @transform_0(%arg0: i32, %arg1: i32, %arg2: i32) -> (i32, i32) {
    %c0_i32 = arith.constant 0 : i32
    return %arg0, %arg2 : i32, i32
  }
  func.func @transform_1(%arg0: i32, %arg1: i32, %arg2: i32) -> (i32, i32) {
    %c0_i32 = arith.constant 0 : i32
    return %arg2, %arg1 : i32, i32
  }
  func.func @transform_2(%arg0: i32, %arg1: i32, %arg2: i32) -> (i32, i32) {
    %c0_i32 = arith.constant 0 : i32
    %c0_i32_0 = arith.constant 0 : i32
    return %c0_i32, %arg1 : i32, i32
  }
  func.func @transform_3(%arg0: i32, %arg1: i32, %arg2: i32) -> (i32, i32) {
    %c0_i32 = arith.constant 0 : i32
    return %arg0, %arg1 : i32, i32
  }
}

</mosaic_0001>

<llo_original>
// kernel: my_linear.1
$region0: #{my_linear.1}
  #allocation0 [shape = 'u32[]', space=smem, size = 0x4, offset = 0x4, fixed_abs, tag = 'smem constant byte address 0x4 - core index']
  #allocation1 [shape = 'u32[144,128]{1,0:T(1,128)}', space=vmem, size = 0x12000, scoped, tag = 'internal scratch']
  %s0 = inlined_call_operand.vmem [shape: f32[16,1024], index: 0, kind: input, shape index: {}]
  %s1 = inlined_call_operand.vmem [shape: f32[1024,128], index: 1, kind: input, shape index: {}]
  %s2 = inlined_call_operand.vmem [shape: f32[1,128], index: 2, kind: input, shape index: {}]
  %s3 = inlined_call_operand.hbm [shape: f32[16,128], index: 3, kind: output, shape index: {}]
  %s4 = sld [smem:[#allocation0]]
  $region30: #{my_linear.1} parent=0
    _
  %s6 = ssub.s32 1, %s4
  %s7 = scalar_select 0, %s6, %s4
  $region1: #{my_linear.1} parent=0
    #allocation2 [shape = 'u8[8192]{0}', space=vmem, size = 0x2000, scoped, tag = 'output window, operand 0, single buffered']
    #allocation3 [shape = 's32[1]{0}', space=sflag, size = 0x4, scoped, tag = 'scoped memory for my_linear.1']
    %8 = vsyncpa [#allocation3], 0
    // Predicated region
    $region2: #{my_linear.1} parent=1 // pred_check
      _
    $region3: #{my_linear.1} parent=1 // pred_check_branch
      %10 = sbr.rel (0) target = $region5
    $region4: #{my_linear.1} parent=1 // pred_region
      _
    $region5: #{my_linear.1} parent=1 // pred_fallthru
      _
    // Predicated region
    $region6: #{my_linear.1} parent=1 // pred_check
      _
    $region7: #{my_linear.1} parent=1 // pred_check_branch
      %12 = sbr.rel (0) target = $region9
    $region8: #{my_linear.1} parent=1 // pred_region
      _
    $region9: #{my_linear.1} parent=1 // pred_fallthru
      _
    // Predicated region
    $region10: #{my_linear.1} parent=1 // pred_check
      _
    $region11: #{my_linear.1} parent=1 // pred_check_branch
      %14 = sbr.rel (0) target = $region13
    $region12: #{my_linear.1} parent=1 // pred_region
      _
    $region13: #{my_linear.1} parent=1 // pred_fallthru
      _
    %p15 = scmp.eq.s32.totalorder 0, 0
    // Predicated region
    $region14: #{my_linear.1} parent=1 // pred_check
      %p16 = pneg %p15
    $region15: #{my_linear.1} parent=1 // pred_check_branch
      %18 = sbr.rel (%p16) target = $region17
    $region16: #{my_linear.1} parent=1 // pred_region
      %19 = vst [vmem:[#allocation2] sm:$0xff] 0.0
      %20 = vst [vmem:[#allocation2 + $0x8] sm:$0xff] 0.0
    $region17: #{my_linear.1} parent=1 // pred_fallthru
      _
    %v21 = vld [vmem:[#allocation2] sm:$0xff]
    %v22 = vld [vmem:[#allocation2 + $0x8] sm:$0xff]
    %v23 = vld [vmem:[%s0] sm:$0xff]
    %v24 = vld [vmem:[%s0 + $0x8] sm:$0xff]
    %v25 = vld [vmem:[%s0 + $0x10] sm:$0xff]
    %v26 = vld [vmem:[%s0 + $0x18] sm:$0xff]
    %v27 = vld [vmem:[%s0 + $0x20] sm:$0xff]
    %v28 = vld [vmem:[%s0 + $0x28] sm:$0xff]
    %v29 = vld [vmem:[%s0 + $0x30] sm:$0xff]
    %v30 = vld [vmem:[%s0 + $0x38] sm:$0xff]
    %v31 = vld [vmem:[%s0 + $0x40] sm:$0xff]
    %v32 = vld [vmem:[%s0 + $0x48] sm:$0xff]
    %v33 = vld [vmem:[%s0 + $0x50] sm:$0xff]
    %v34 = vld [vmem:[%s0 + $0x58] sm:$0xff]
    %v35 = vld [vmem:[%s0 + $0x60] sm:$0xff]
    %v36 = vld [vmem:[%s0 + $0x68] sm:$0xff]
    %v37 = vld [vmem:[%s0 + $0x70] sm:$0xff]
    %v38 = vld [vmem:[%s0 + $0x78] sm:$0xff]
    %v39 = vld [vmem:[%s1] sm:$0xff]
    %v40 = vld [vmem:[%s1 + $0x8] sm:$0xff]
    %v41 = vld [vmem:[%s1 + $0x10] sm:$0xff]
    %v42 = vld [vmem:[%s1 + $0x18] sm:$0xff]
    %v43 = vld [vmem:[%s1 + $0x20] sm:$0xff]
    %v44 = vld [vmem:[%s1 + $0x28] sm:$0xff]
    %v45 = vld [vmem:[%s1 + $0x30] sm:$0xff]
    %v46 = vld [vmem:[%s1 + $0x38] sm:$0xff]
    %v47 = vld [vmem:[%s1 + $0x40] sm:$0xff]
    %v48 = vld [vmem:[%s1 + $0x48] sm:$0xff]
    %v49 = vld [vmem:[%s1 + $0x50] sm:$0xff]
    %v50 = vld [vmem:[%s1 + $0x58] sm:$0xff]
    %v51 = vld [vmem:[%s1 + $0x60] sm:$0xff]
    %v52 = vld [vmem:[%s1 + $0x68] sm:$0xff]
    %v53 = vld [vmem:[%s1 + $0x70] sm:$0xff]
    %v54 = vld [vmem:[%s1 + $0x78] sm:$0xff]
    %v55 = vld [vmem:[%s1 + $0x80] sm:$0xff]
    %v56 = vld [vmem:[%s1 + $0x88] sm:$0xff]
    %v57 = vld [vmem:[%s1 + $0x90] sm:$0xff]
    %v58 = vld [vmem:[%s1 + $0x98] sm:$0xff]
    %v59 = vld [vmem:[%s1 + $0xa0] sm:$0xff]
    %v60 = vld [vmem:[%s1 + $0xa8] sm:$0xff]
    %v61 = vld [vmem:[%s1 + $0xb0] sm:$0xff]
    %v62 = vld [vmem:[%s1 + $0xb8] sm:$0xff]
    %v63 = vld [vmem:[%s1 + $0xc0] sm:$0xff]
    %v64 = vld [vmem:[%s1 + $0xc8] sm:$0xff]
    %v65 = vld [vmem:[%s1 + $0xd0] sm:$0xff]
    %v66 = vld [vmem:[%s1 + $0xd8] sm:$0xff]
    %v67 = vld [vmem:[%s1 + $0xe0] sm:$0xff]
    %v68 = vld [vmem:[%s1 + $0xe8] sm:$0xff]
    %v69 = vld [vmem:[%s1 + $0xf0] sm:$0xff]
    %v70 = vld [vmem:[%s1 + $0xf8] sm:$0xff]
    %v71 = vld [vmem:[%s1 + $0x100] sm:$0xff]
    %v72 = vld [vmem:[%s1 + $0x108] sm:$0xff]
    %v73 = vld [vmem:[%s1 + $0x110] sm:$0xff]
    %v74 = vld [vmem:[%s1 + $0x118] sm:$0xff]
    %v75 = vld [vmem:[%s1 + $0x120] sm:$0xff]
    %v76 = vld [vmem:[%s1 + $0x128] sm:$0xff]
    %v77 = vld [vmem:[%s1 + $0x130] sm:$0xff]
    %v78 = vld [vmem:[%s1 + $0x138] sm:$0xff]
    %v79 = vld [vmem:[%s1 + $0x140] sm:$0xff]
    %v80 = vld [vmem:[%s1 + $0x148] sm:$0xff]
    %v81 = vld [vmem:[%s1 + $0x150] sm:$0xff]
    %v82 = vld [vmem:[%s1 + $0x158] sm:$0xff]
    %v83 = vld [vmem:[%s1 + $0x160] sm:$0xff]
    %v84 = vld [vmem:[%s1 + $0x168] sm:$0xff]
    %v85 = vld [vmem:[%s1 + $0x170] sm:$0xff]
    %v86 = vld [vmem:[%s1 + $0x178] sm:$0xff]
    %v87 = vld [vmem:[%s1 + $0x180] sm:$0xff]
    %v88 = vld [vmem:[%s1 + $0x188] sm:$0xff]
    %v89 = vld [vmem:[%s1 + $0x190] sm:$0xff]
    %v90 = vld [vmem:[%s1 + $0x198] sm:$0xff]
    %v91 = vld [vmem:[%s1 + $0x1a0] sm:$0xff]
    %v92 = vld [vmem:[%s1 + $0x1a8] sm:$0xff]
    %v93 = vld [vmem:[%s1 + $0x1b0] sm:$0xff]
    %v94 = vld [vmem:[%s1 + $0x1b8] sm:$0xff]
    %v95 = vld [vmem:[%s1 + $0x1c0] sm:$0xff]
    %v96 = vld [vmem:[%s1 + $0x1c8] sm:$0xff]
    %v97 = vld [vmem:[%s1 + $0x1d0] sm:$0xff]
    %v98 = vld [vmem:[%s1 + $0x1d8] sm:$0xff]
    %v99 = vld [vmem:[%s1 + $0x1e0] sm:$0xff]
    %v100 = vld [vmem:[%s1 + $0x1e8] sm:$0xff]
    %v101 = vld [vmem:[%s1 + $0x1f0] sm:$0xff]
    %v102 = vld [vmem:[%s1 + $0x1f8] sm:$0xff]
    %v103 = vld [vmem:[%s1 + $0x200] sm:$0xff]
    %v104 = vld [vmem:[%s1 + $0x208] sm:$0xff]
    %v105 = vld [vmem:[%s1 + $0x210] sm:$0xff]
    %v106 = vld [vmem:[%s1 + $0x218] sm:$0xff]
    %v107 = vld [vmem:[%s1 + $0x220] sm:$0xff]
    %v108 = vld [vmem:[%s1 + $0x228] sm:$0xff]
    %v109 = vld [vmem:[%s1 + $0x230] sm:$0xff]
    %v110 = vld [vmem:[%s1 + $0x238] sm:$0xff]
    %v111 = vld [vmem:[%s1 + $0x240] sm:$0xff]
    %v112 = vld [vmem:[%s1 + $0x248] sm:$0xff]
    %v113 = vld [vmem:[%s1 + $0x250] sm:$0xff]
    %v114 = vld [vmem:[%s1 + $0x258] sm:$0xff]
    %v115 = vld [vmem:[%s1 + $0x260] sm:$0xff]
    %v116 = vld [vmem:[%s1 + $0x268] sm:$0xff]
    %v117 = vld [vmem:[%s1 + $0x270] sm:$0xff]
    %v118 = vld [vmem:[%s1 + $0x278] sm:$0xff]
    %v119 = vld [vmem:[%s1 + $0x280] sm:$0xff]
    %v120 = vld [vmem:[%s1 + $0x288] sm:$0xff]
    %v121 = vld [vmem:[%s1 + $0x290] sm:$0xff]
    %v122 = vld [vmem:[%s1 + $0x298] sm:$0xff]
    %v123 = vld [vmem:[%s1 + $0x2a0] sm:$0xff]
    %v124 = vld [vmem:[%s1 + $0x2a8] sm:$0xff]
    %v125 = vld [vmem:[%s1 + $0x2b0] sm:$0xff]
    %v126 = vld [vmem:[%s1 + $0x2b8] sm:$0xff]
    %v127 = vld [vmem:[%s1 + $0x2c0] sm:$0xff]
    %v128 = vld [vmem:[%s1 + $0x2c8] sm:$0xff]
    %v129 = vld [vmem:[%s1 + $0x2d0] sm:$0xff]
    %v130 = vld [vmem:[%s1 + $0x2d8] sm:$0xff]
    %v131 = vld [vmem:[%s1 + $0x2e0] sm:$0xff]
    %v132 = vld [vmem:[%s1 + $0x2e8] sm:$0xff]
    %v133 = vld [vmem:[%s1 + $0x2f0] sm:$0xff]
    %v134 = vld [vmem:[%s1 + $0x2f8] sm:$0xff]
    %v135 = vld [vmem:[%s1 + $0x300] sm:$0xff]
    %v136 = vld [vmem:[%s1 + $0x308] sm:$0xff]
    %v137 = vld [vmem:[%s1 + $0x310] sm:$0xff]
    %v138 = vld [vmem:[%s1 + $0x318] sm:$0xff]
    %v139 = vld [vmem:[%s1 + $0x320] sm:$0xff]
    %v140 = vld [vmem:[%s1 + $0x328] sm:$0xff]
    %v141 = vld [vmem:[%s1 + $0x330] sm:$0xff]
    %v142 = vld [vmem:[%s1 + $0x338] sm:$0xff]
    %v143 = vld [vmem:[%s1 + $0x340] sm:$0xff]
    %v144 = vld [vmem:[%s1 + $0x348] sm:$0xff]
    %v145 = vld [vmem:[%s1 + $0x350] sm:$0xff]
    %v146 = vld [vmem:[%s1 + $0x358] sm:$0xff]
    %v147 = vld [vmem:[%s1 + $0x360] sm:$0xff]
    %v148 = vld [vmem:[%s1 + $0x368] sm:$0xff]
    %v149 = vld [vmem:[%s1 + $0x370] sm:$0xff]
    %v150 = vld [vmem:[%s1 + $0x378] sm:$0xff]
    %v151 = vld [vmem:[%s1 + $0x380] sm:$0xff]
    %v152 = vld [vmem:[%s1 + $0x388] sm:$0xff]
    %v153 = vld [vmem:[%s1 + $0x390] sm:$0xff]
    %v154 = vld [vmem:[%s1 + $0x398] sm:$0xff]
    %v155 = vld [vmem:[%s1 + $0x3a0] sm:$0xff]
    %v156 = vld [vmem:[%s1 + $0x3a8] sm:$0xff]
    %v157 = vld [vmem:[%s1 + $0x3b0] sm:$0xff]
    %v158 = vld [vmem:[%s1 + $0x3b8] sm:$0xff]
    %v159 = vld [vmem:[%s1 + $0x3c0] sm:$0xff]
    %v160 = vld [vmem:[%s1 + $0x3c8] sm:$0xff]
    %v161 = vld [vmem:[%s1 + $0x3d0] sm:$0xff]
    %v162 = vld [vmem:[%s1 + $0x3d8] sm:$0xff]
    %v163 = vld [vmem:[%s1 + $0x3e0] sm:$0xff]
    %v164 = vld [vmem:[%s1 + $0x3e8] sm:$0xff]
    %v165 = vld [vmem:[%s1 + $0x3f0] sm:$0xff]
    %v166 = vld [vmem:[%s1 + $0x3f8] sm:$0xff]
    %167 = vmatprep.subr.mxu0 0.0
    %168 = vmatpush1.msra.mxu0 %v54
    %169 = vmatprep.subr.mxu0 0.0
    %170 = vmatpush1.msra.mxu0 %v53
    %171 = vmatprep.subr.mxu0 0.0
    %172 = vmatpush1.msra.mxu0 %v52
    %173 = vmatprep.subr.mxu0 0.0
    %174 = vmatpush1.msra.mxu0 %v51
    %175 = vmatprep.subr.mxu0 0.0
    %176 = vmatpush1.msra.mxu0 %v50
    %177 = vmatprep.subr.mxu0 0.0
    %178 = vmatpush1.msra.mxu0 %v49
    %179 = vmatprep.subr.mxu0 0.0
    %180 = vmatpush1.msra.mxu0 %v48
    %181 = vmatprep.subr.mxu0 0.0
    %182 = vmatpush1.msra.mxu0 %v47
    %183 = vmatprep.subr.mxu0 0.0
    %184 = vmatpush1.msra.mxu0 %v46
    %185 = vmatprep.subr.mxu0 0.0
    %186 = vmatpush1.msra.mxu0 %v45
    %187 = vmatprep.subr.mxu0 0.0
    %188 = vmatpush1.msra.mxu0 %v44
    %189 = vmatprep.subr.mxu0 0.0
    %190 = vmatpush1.msra.mxu0 %v43
    %191 = vmatprep.subr.mxu0 0.0
    %192 = vmatpush1.msra.mxu0 %v42
    %193 = vmatprep.subr.mxu0 0.0
    %194 = vmatpush1.msra.mxu0 %v41
    %195 = vmatprep.subr.mxu0 0.0
    %196 = vmatpush1.msra.mxu0 %v40
    %197 = vmatprep.subr.mxu0 0.0
    %198 = vmatpush1.msra.mxu0 %v39
    %199 = vmatprep.subr.mxu0 0.0
    %200 = vmatpush2.msra.mxu0 %v70
    %201 = vmatprep.subr.mxu0 0.0
    %202 = vmatpush2.msra.mxu0 %v69
    %203 = vmatprep.subr.mxu0 0.0
    %204 = vmatpush2.msra.mxu0 %v68
    %205 = vmatprep.subr.mxu0 0.0
    %206 = vmatpush2.msra.mxu0 %v67
    %207 = vmatprep.subr.mxu0 0.0
    %208 = vmatpush2.msra.mxu0 %v66
    %209 = vmatprep.subr.mxu0 0.0
    %210 = vmatpush2.msra.mxu0 %v65
    %211 = vmatprep.subr.mxu0 0.0
    %212 = vmatpush2.msra.mxu0 %v64
    %213 = vmatprep.subr.mxu0 0.0
    %214 = vmatpush2.msra.mxu0 %v63
    %215 = vmatprep.subr.mxu0 0.0
    %216 = vmatpush2.msra.mxu0 %v62
    %217 = vmatprep.subr.mxu0 0.0
    %218 = vmatpush2.msra.mxu0 %v61
    %219 = vmatprep.subr.mxu0 0.0
    %220 = vmatpush2.msra.mxu0 %v60
    %221 = vmatprep.subr.mxu0 0.0
    %222 = vmatpush2.msra.mxu0 %v59
    %223 = vmatprep.subr.mxu0 0.0
    %224 = vmatpush2.msra.mxu0 %v58
    %225 = vmatprep.subr.mxu0 0.0
    %226 = vmatpush2.msra.mxu0 %v57
    %227 = vmatprep.subr.mxu0 0.0
    %228 = vmatpush2.msra.mxu0 %v56
    %229 = vmatprep.subr.mxu0 0.0
    %230 = vmatpush2.msra.mxu0 %v55
    %231 = vmatprep.mubr.f32.mxu0 %v24
    %232 = vmatmul.mubr.f32.gmra.mxu0 %v23
    %v233 = vpop.f32.mrf.mxu0
    %v234 = vadd.f32 0.0, %v233
    %v235 = vpop.f32.mrf.mxu0
    %236 = vmatprep.mubr.f32.mxu0 %v32
    %237 = vmatmul.mubr.f32.gmra.mxu0 %v31
    %v238 = vpop.f32.mrf.mxu0
    %v239 = vadd.f32 0.0, %v238
    %v240 = vpop.f32.mrf.mxu0
    %241 = vdwg.mxu0
    %242 = vmatprep.subr.mxu0 0.0
    %243 = vmatpush1.msra.mxu0 %v86
    %244 = vmatprep.subr.mxu0 0.0
    %245 = vmatpush1.msra.mxu0 %v85
    %246 = vmatprep.subr.mxu0 0.0
    %247 = vmatpush1.msra.mxu0 %v84
    %248 = vmatprep.subr.mxu0 0.0
    %249 = vmatpush1.msra.mxu0 %v83
    %250 = vmatprep.subr.mxu0 0.0
    %251 = vmatpush1.msra.mxu0 %v82
    %252 = vmatprep.subr.mxu0 0.0
    %253 = vmatpush1.msra.mxu0 %v81
    %254 = vmatprep.subr.mxu0 0.0
    %255 = vmatpush1.msra.mxu0 %v80
    %256 = vmatprep.subr.mxu0 0.0
    %257 = vmatpush1.msra.mxu0 %v79
    %258 = vmatprep.subr.mxu0 0.0
    %259 = vmatpush1.msra.mxu0 %v78
    %260 = vmatprep.subr.mxu0 0.0
    %261 = vmatpush1.msra.mxu0 %v77
    %262 = vmatprep.subr.mxu0 0.0
    %263 = vmatpush1.msra.mxu0 %v76
    %264 = vmatprep.subr.mxu0 0.0
    %265 = vmatpush1.msra.mxu0 %v75
    %266 = vmatprep.subr.mxu0 0.0
    %267 = vmatpush1.msra.mxu0 %v74
    %268 = vmatprep.subr.mxu0 0.0
    %269 = vmatpush1.msra.mxu0 %v73
    %270 = vmatprep.subr.mxu0 0.0
    %271 = vmatpush1.msra.mxu0 %v72
    %272 = vmatprep.subr.mxu0 0.0
    %273 = vmatpush1.msra.mxu0 %v71
    %274 = vmatprep.subr.mxu0 0.0
    %275 = vmatpush2.msra.mxu0 %v102
    %276 = vmatprep.subr.mxu0 0.0
    %277 = vmatpush2.msra.mxu0 %v101
    %278 = vmatprep.subr.mxu0 0.0
    %279 = vmatpush2.msra.mxu0 %v100
    %280 = vmatprep.subr.mxu0 0.0
    %281 = vmatpush2.msra.mxu0 %v99
    %282 = vmatprep.subr.mxu0 0.0
    %283 = vmatpush2.msra.mxu0 %v98
    %284 = vmatprep.subr.mxu0 0.0
    %285 = vmatpush2.msra.mxu0 %v97
    %286 = vmatprep.subr.mxu0 0.0
    %287 = vmatpush2.msra.mxu0 %v96
    %288 = vmatprep.subr.mxu0 0.0
    %289 = vmatpush2.msra.mxu0 %v95
    %290 = vmatprep.subr.mxu0 0.0
    %291 = vmatpush2.msra.mxu0 %v94
    %292 = vmatprep.subr.mxu0 0.0
    %293 = vmatpush2.msra.mxu0 %v93
    %294 = vmatprep.subr.mxu0 0.0
    %295 = vmatpush2.msra.mxu0 %v92
    %296 = vmatprep.subr.mxu0 0.0
    %297 = vmatpush2.msra.mxu0 %v91
    %298 = vmatprep.subr.mxu0 0.0
    %299 = vmatpush2.msra.mxu0 %v90
    %300 = vmatprep.subr.mxu0 0.0
    %301 = vmatpush2.msra.mxu0 %v89
    %302 = vmatprep.subr.mxu0 0.0
    %303 = vmatpush2.msra.mxu0 %v88
    %304 = vmatprep.subr.mxu0 0.0
    %305 = vmatpush2.msra.mxu0 %v87
    %306 = vmatprep.mubr.f32.mxu0 %v26
    %307 = vmatmul.mubr.f32.gmra.mxu0 %v25
    %v308 = vpop.f32.mrf.mxu0
    %v309 = vadd.f32 %v234, %v308
    %v310 = vpop.f32.mrf.mxu0
    %311 = vmatprep.mubr.f32.mxu0 %v34
    %312 = vmatmul.mubr.f32.gmra.mxu0 %v33
    %v313 = vpop.f32.mrf.mxu0
    %v314 = vadd.f32 %v239, %v313
    %v315 = vpop.f32.mrf.mxu0
    %316 = vdwg.mxu0
    %317 = vmatprep.subr.mxu0 0.0
    %318 = vmatpush1.msra.mxu0 %v118
    %319 = vmatprep.subr.mxu0 0.0
    %320 = vmatpush1.msra.mxu0 %v117
    %321 = vmatprep.subr.mxu0 0.0
    %322 = vmatpush1.msra.mxu0 %v116
    %323 = vmatprep.subr.mxu0 0.0
    %324 = vmatpush1.msra.mxu0 %v115
    %325 = vmatprep.subr.mxu0 0.0
    %326 = vmatpush1.msra.mxu0 %v114
    %327 = vmatprep.subr.mxu0 0.0
    %328 = vmatpush1.msra.mxu0 %v113
    %329 = vmatprep.subr.mxu0 0.0
    %330 = vmatpush1.msra.mxu0 %v112
    %331 = vmatprep.subr.mxu0 0.0
    %332 = vmatpush1.msra.mxu0 %v111
    %333 = vmatprep.subr.mxu0 0.0
    %334 = vmatpush1.msra.mxu0 %v110
    %335 = vmatprep.subr.mxu0 0.0
    %336 = vmatpush1.msra.mxu0 %v109
    %337 = vmatprep.subr.mxu0 0.0
    %338 = vmatpush1.msra.mxu0 %v108
    %339 = vmatprep.subr.mxu0 0.0
    %340 = vmatpush1.msra.mxu0 %v107
    %341 = vmatprep.subr.mxu0 0.0
    %342 = vmatpush1.msra.mxu0 %v106
    %343 = vmatprep.subr.mxu0 0.0
    %344 = vmatpush1.msra.mxu0 %v105
    %345 = vmatprep.subr.mxu0 0.0
    %346 = vmatpush1.msra.mxu0 %v104
    %347 = vmatprep.subr.mxu0 0.0
    %348 = vmatpush1.msra.mxu0 %v103
    %349 = vmatprep.subr.mxu0 0.0
    %350 = vmatpush2.msra.mxu0 %v134
    %351 = vmatprep.subr.mxu0 0.0
    %352 = vmatpush2.msra.mxu0 %v133
    %353 = vmatprep.subr.mxu0 0.0
    %354 = vmatpush2.msra.mxu0 %v132
    %355 = vmatprep.subr.mxu0 0.0
    %356 = vmatpush2.msra.mxu0 %v131
    %357 = vmatprep.subr.mxu0 0.0
    %358 = vmatpush2.msra.mxu0 %v130
    %359 = vmatprep.subr.mxu0 0.0
    %360 = vmatpush2.msra.mxu0 %v129
    %361 = vmatprep.subr.mxu0 0.0
    %362 = vmatpush2.msra.mxu0 %v128
    %363 = vmatprep.subr.mxu0 0.0
    %364 = vmatpush2.msra.mxu0 %v127
    %365 = vmatprep.subr.mxu0 0.0
    %366 = vmatpush2.msra.mxu0 %v126
    %367 = vmatprep.subr.mxu0 0.0
    %368 = vmatpush2.msra.mxu0 %v125
    %369 = vmatprep.subr.mxu0 0.0
    %370 = vmatpush2.msra.mxu0 %v124
    %371 = vmatprep.subr.mxu0 0.0
    %372 = vmatpush2.msra.mxu0 %v123
    %373 = vmatprep.subr.mxu0 0.0
    %374 = vmatpush2.msra.mxu0 %v122
    %375 = vmatprep.subr.mxu0 0.0
    %376 = vmatpush2.msra.mxu0 %v121
    %377 = vmatprep.subr.mxu0 0.0
    %378 = vmatpush2.msra.mxu0 %v120
    %379 = vmatprep.subr.mxu0 0.0
    %380 = vmatpush2.msra.mxu0 %v119
    %381 = vmatprep.mubr.f32.mxu0 %v28
    %382 = vmatmul.mubr.f32.gmra.mxu0 %v27
    %v383 = vpop.f32.mrf.mxu0
    %v384 = vadd.f32 %v309, %v383
    %v385 = vpop.f32.mrf.mxu0
    %386 = vmatprep.mubr.f32.mxu0 %v36
    %387 = vmatmul.mubr.f32.gmra.mxu0 %v35
    %v388 = vpop.f32.mrf.mxu0
    %v389 = vadd.f32 %v314, %v388
    %v390 = vpop.f32.mrf.mxu0
    %391 = vdwg.mxu0
    %392 = vmatprep.subr.mxu0 0.0
    %393 = vmatpush1.msra.mxu0 %v150
    %394 = vmatprep.subr.mxu0 0.0
    %395 = vmatpush1.msra.mxu0 %v149
    %396 = vmatprep.subr.mxu0 0.0
    %397 = vmatpush1.msra.mxu0 %v148
    %398 = vmatprep.subr.mxu0 0.0
    %399 = vmatpush1.msra.mxu0 %v147
    %400 = vmatprep.subr.mxu0 0.0
    %401 = vmatpush1.msra.mxu0 %v146
    %402 = vmatprep.subr.mxu0 0.0
    %403 = vmatpush1.msra.mxu0 %v145
    %404 = vmatprep.subr.mxu0 0.0
    %405 = vmatpush1.msra.mxu0 %v144
    %406 = vmatprep.subr.mxu0 0.0
    %407 = vmatpush1.msra.mxu0 %v143
    %408 = vmatprep.subr.mxu0 0.0
    %409 = vmatpush1.msra.mxu0 %v142
    %410 = vmatprep.subr.mxu0 0.0
    %411 = vmatpush1.msra.mxu0 %v141
    %412 = vmatprep.subr.mxu0 0.0
    %413 = vmatpush1.msra.mxu0 %v140
    %414 = vmatprep.subr.mxu0 0.0
    %415 = vmatpush1.msra.mxu0 %v139
    %416 = vmatprep.subr.mxu0 0.0
    %417 = vmatpush1.msra.mxu0 %v138
    %418 = vmatprep.subr.mxu0 0.0
    %419 = vmatpush1.msra.mxu0 %v137
    %420 = vmatprep.subr.mxu0 0.0
    %421 = vmatpush1.msra.mxu0 %v136
    %422 = vmatprep.subr.mxu0 0.0
    %423 = vmatpush1.msra.mxu0 %v135
    %424 = vmatprep.subr.mxu0 0.0
    %425 = vmatpush2.msra.mxu0 %v166
    %426 = vmatprep.subr.mxu0 0.0
    %427 = vmatpush2.msra.mxu0 %v165
    %428 = vmatprep.subr.mxu0 0.0
    %429 = vmatpush2.msra.mxu0 %v164
    %430 = vmatprep.subr.mxu0 0.0
    %431 = vmatpush2.msra.mxu0 %v163
    %432 = vmatprep.subr.mxu0 0.0
    %433 = vmatpush2.msra.mxu0 %v162
    %434 = vmatprep.subr.mxu0 0.0
    %435 = vmatpush2.msra.mxu0 %v161
    %436 = vmatprep.subr.mxu0 0.0
    %437 = vmatpush2.msra.mxu0 %v160
    %438 = vmatprep.subr.mxu0 0.0
    %439 = vmatpush2.msra.mxu0 %v159
    %440 = vmatprep.subr.mxu0 0.0
    %441 = vmatpush2.msra.mxu0 %v158
    %442 = vmatprep.subr.mxu0 0.0
    %443 = vmatpush2.msra.mxu0 %v157
    %444 = vmatprep.subr.mxu0 0.0
    %445 = vmatpush2.msra.mxu0 %v156
    %446 = vmatprep.subr.mxu0 0.0
    %447 = vmatpush2.msra.mxu0 %v155
    %448 = vmatprep.subr.mxu0 0.0
    %449 = vmatpush2.msra.mxu0 %v154
    %450 = vmatprep.subr.mxu0 0.0
    %451 = vmatpush2.msra.mxu0 %v153
    %452 = vmatprep.subr.mxu0 0.0
    %453 = vmatpush2.msra.mxu0 %v152
    %454 = vmatprep.subr.mxu0 0.0
    %455 = vmatpush2.msra.mxu0 %v151
    %456 = vmatprep.mubr.f32.mxu0 %v30
    %457 = vmatmul.mubr.f32.gmra.mxu0 %v29
    %v458 = vpop.f32.mrf.mxu0
    %v459 = vadd.f32 %v384, %v458
    %v460 = vpop.f32.mrf.mxu0
    %461 = vmatprep.mubr.f32.mxu0 %v38
    %462 = vmatmul.mubr.f32.gmra.mxu0 %v37
    %v463 = vpop.f32.mrf.mxu0
    %v464 = vadd.f32 %v389, %v463
    %v465 = vpop.f32.mrf.mxu0
    %466 = vdwg.mxu0
    %v467 = vadd.f32 %v21, %v459
    %v468 = vadd.f32 %v22, %v464
    %469 = vst [vmem:[#allocation2] sm:$0xff] %v467
    %470 = vst [vmem:[#allocation2 + $0x8] sm:$0xff] %v468
    // Predicated region
    $region18: #{my_linear.1} parent=1 // pred_check
      %p471 = pneg %p15
    $region19: #{my_linear.1} parent=1 // pred_check_branch
      %473 = sbr.rel (%p471) target = $region21
    $region20: #{my_linear.1} parent=1 // pred_region
      %v474 = vld [vmem:[#allocation2] sm:$0xff]
      %v475 = vld [vmem:[#allocation2 + $0x8] sm:$0xff]
      %v476 = vld [vmem:[%s2] sm:$0x1]
      %v478 = vlaneseq
      %v479 = vshrl.u32 %v478, 7
      %v480 = vsub.s32 0, %v479
      %v481 = vrot.slane %v476, %v480
      %v483 = vadd.f32 %v474, %v481
      %v484 = vadd.f32 %v475, %v481
      %485 = vst [vmem:[#allocation2] sm:$0xff] %v483
      %486 = vst [vmem:[#allocation2 + $0x8] sm:$0xff] %v484
    $region21: #{my_linear.1} parent=1 // pred_fallthru
      _
    // Predicated region
    $region22: #{my_linear.1} parent=1 // pred_check
      _
    $region23: #{my_linear.1} parent=1 // pred_check_branch
      %488 = sbr.rel (0) target = $region25
    $region24: #{my_linear.1} parent=1 // pred_region
      %s490 = ssub.s32 256, 256
      %491 = vsyncadd [#allocation3], %s490
      %s492 = sshll.u32 [#allocation2], 4
      %s493 = int_to_ptr.vmem [resolvable:$true] %s492
      %498 = dma.vmem_to_hbm [thread:$0]  %s493, 256, %s3, [#allocation3], 128, 128, 8
    $region25: #{my_linear.1} parent=1 // pred_fallthru
      _
    // Predicated region
    $region26: #{my_linear.1} parent=1 // pred_check
      _
    $region27: #{my_linear.1} parent=1 // pred_check_branch
      %500 = sbr.rel (0) target = $region29
    $region28: #{my_linear.1} parent=1 // pred_region
      %501 = dma.done [#allocation3], 256
    $region29: #{my_linear.1} parent=1 // pred_fallthru
      _
    %502 = vsyncpa [#allocation3], 1

</llo_original>
